<compile_context>
chip_gen: v7x
topology: tpu7x:2x2x1
jax: 0.10.0
libtpu: 0.0.40
codegen_flags: <defaults>
</compile_context>

<pallas_src>
import functools
import math

import jax
import jax.numpy as jnp
from jax.experimental import pallas as pl
from jax.experimental.pallas import tpu as pltpu


def _round_up(x, m):
    return (x + m - 1) // m * m


def _lcm(a, b):
    return a * b // math.gcd(a, b)


# --------------------------------------------------------------------------- kernel
def _wa_linear_kernel(*refs, group_size, has_bias):
    if has_bias:
        x_hi_ref, x_lo_ref, wq_ref, z_ref, s_ref, b_ref, o_ref, acc_ref = refs
    else:
        x_hi_ref, x_lo_ref, wq_ref, z_ref, s_ref, o_ref, acc_ref = refs
        b_ref = None

    k = pl.program_id(2)

    @pl.when(k == 0)
    def _init():
        acc_ref[...] = jnp.zeros_like(acc_ref)

    # Unpack this (tkh, tn) tile of packed 4-bit weights.  hi nibble -> first K half,
    # lo nibble -> second K half (contiguous-halves convention set up in the wrapper).
    q = wq_ref[...].astype(jnp.int32)
    hi = (q >> 4).astype(jnp.bfloat16)        # values 0..15 (no redundant mask)
    lo = (q & 0xF).astype(jnp.bfloat16)

    # Per-group dequant in bf16.  Group constants are lane-dense (ngt, tn) rows and are
    # broadcast along the sublane direction only (cheap), never across lanes.
    z_hi = jnp.repeat(z_ref[0, 0], group_size, axis=0)    # (tkh, tn)
    z_lo = jnp.repeat(z_ref[0, 1], group_size, axis=0)
    s_hi = jnp.repeat(s_ref[0, 0], group_size, axis=0)
    s_lo = jnp.repeat(s_ref[0, 1], group_size, axis=0)
    w_hi = (hi - z_hi) * s_hi
    w_lo = (lo - z_lo) * s_lo

    # Canonical (tm, tkh) x (tkh, tn) bf16 MXU matmuls with f32 accumulation.
    acc_ref[...] += (
        jnp.dot(x_hi_ref[...], w_hi, preferred_element_type=jnp.float32)
        + jnp.dot(x_lo_ref[...], w_lo, preferred_element_type=jnp.float32)
    )

    @pl.when(k == pl.num_programs(2) - 1)
    def _finalize():
        r = acc_ref[...]
        if has_bias:
            r = r + b_ref[...].astype(jnp.float32)
        o_ref[...] = r.astype(o_ref.dtype)


# ----------------------------------------------------------------- offline weight prep
def prepare_wa_weights(wq, zeros_scales, bias, *, group_size=64):
    """One-time (weight-load-time) repack of WALinear buffers for the TPU kernel.

    wq:            (N, K//2) uint8, hi nibble = even K index, lo nibble = odd K index.
    zeros_scales:  (N, 2*K//group_size), per-group [zero, scale] interleaved.
    bias:          (1, N) or None.
    """
    N, kb = wq.shape
    K = 2 * kb
    assert K % group_size == 0
    ng = K // group_size
    assert ng % 2 == 0, "K must be a multiple of 2*group_size"
    assert N % 128 == 0, "out_features must be a multiple of 128"
    assert zeros_scales.shape == (N, 2 * ng)
    kh = K // 2

    # Unpack the original (hi=even, lo=odd) layout and repack to contiguous halves,
    # transposed to K-major so the kernel RHS is already (K, N).
    q = wq.astype(jnp.uint8)
    hi = (q >> 4).astype(jnp.uint8)                     # original K index 2j
    lo = (q & 0xF).astype(jnp.uint8)                    # original K index 2j+1
    q_full = jnp.stack([hi, lo], axis=-1).reshape(N, K)  # (N, K) nibble values
    packed = ((q_full[:, :kh] << 4) | q_full[:, kh:]).astype(jnp.uint8)  # (N, kh)
    wq_t = packed.T                                      # (kh, N)

    # Pad packed-K once so runtime tiling never pads the weight.
    base_pad = _lcm(group_size, 512) if kh >= 512 else _lcm(group_size, 128)
    kh_pad = _round_up(kh, base_pad)
    if kh_pad != kh:
        wq_t = jnp.pad(wq_t, ((0, kh_pad - kh), (0, 0)))

    # De-interleave zero/scale, split per K half, make lane-dense (N last), pad groups.
    zs = zeros_scales.reshape(N, ng, 2).astype(jnp.bfloat16)
    zero_t = zs[:, :, 0].T                               # (ng, N)
    scale_t = zs[:, :, 1].T
    ng_half = ng // 2
    ng_half_pad = kh_pad // group_size

    def _halves(tbl):
        t_hi, t_lo = tbl[:ng_half], tbl[ng_half:]
        pad = ng_half_pad - ng_half
        if pad:
            t_hi = jnp.pad(t_hi, ((0, pad), (0, 0)))
            t_lo = jnp.pad(t_lo, ((0, pad), (0, 0)))
        return jnp.stack([t_hi, t_lo], axis=0)           # (2, ng_half_pad, N)

    zeros_t = _halves(zero_t)
    scales_t = _halves(scale_t)

    if bias is not None:
        bias = jnp.asarray(bias).reshape(1, N)

    return dict(wq_t=wq_t, zeros=zeros_t, scales=scales_t, bias=bias,
                K=K, kh=kh, kh_pad=kh_pad, N=N, group_size=group_size)


# ------------------------------------------------------------------------ forward pass
def wa_linear(x, prepared):
    """x: (..., K).  Returns (..., N) in x.dtype."""
    K, N = prepared["K"], prepared["N"]
    gs = prepared["group_size"]
    kh, kh_pad = prepared["kh"], prepared["kh_pad"]
    bias = prepared["bias"]
    has_bias = bias is not None

    lead = x.shape[:-1]
    assert x.shape[-1] == K
    x2 = x.reshape(-1, K)
    M = x2.shape[0]
    out_dtype = x.dtype
    if x2.dtype != jnp.bfloat16:
        x2 = x2.astype(jnp.bfloat16)

    # --- tile selection (decode = small M, prefill = large M) ---
    small_m = M <= 128
    if M >= 512:
        tile_m = 512
    elif M >= 256:
        tile_m = 256
    else:
        tile_m = _round_up(max(M, 1), 16)           # bf16 sublane packing
    if small_m and N % 512 == 0:
        tile_n = 512
    elif N % 256 == 0:
        tile_n = 256
    else:
        tile_n = 128

    base = _lcm(gs, 128)                            # K-tile granularity
    cap = max(1024 if small_m else 512, base)
    tkh = base
    t = (cap // base) * base
    while t >= base:                                # largest K tile dividing kh_pad
        if kh_pad % t == 0:
            tkh = t
            break
        t -= base
    nkt = kh_pad // tkh
    ngt = tkh // gs
    m_pad = _round_up(M, tile_m)

    # --- activations: two contiguous K halves packed into one array ---
    if kh_pad == kh:
        x3 = x2                                     # zero-cost: halves are already contiguous
    else:
        x3 = jnp.concatenate(
            [jnp.pad(x2[:, :kh], ((0, 0), (0, kh_pad - kh))),
             jnp.pad(x2[:, kh:], ((0, 0), (0, kh_pad - kh)))], axis=1)
    if m_pad != M:
        x3 = jnp.pad(x3, ((0, m_pad - M), (0, 0)))

    # --- tiny per-call reshape of the group tables to (nkt, 2, ngt, N) ---
    zeros = prepared["zeros"].reshape(2, nkt, ngt, N).transpose(1, 0, 2, 3)
    scales = prepared["scales"].reshape(2, nkt, ngt, N).transpose(1, 0, 2, 3)

    kernel = functools.partial(_wa_linear_kernel, group_size=gs, has_bias=has_bias)

    in_specs = [
        pl.BlockSpec((tile_m, tkh), lambda i, j, k: (i, k)),                    # x, first K half
        pl.BlockSpec((tile_m, tkh), lambda i, j, k, _n=nkt: (i, k + _n)),       # x, second K half
        pl.BlockSpec((tkh, tile_n), lambda i, j, k: (k, j)),                    # packed 4-bit W (K-major)
        pl.BlockSpec((1, 2, ngt, tile_n), lambda i, j, k: (k, 0, 0, j)),        # zeros (lane-dense)
        pl.BlockSpec((1, 2, ngt, tile_n), lambda i, j, k: (k, 0, 0, j)),        # scales (lane-dense)
    ]
    args = [x3, x3, prepared["wq_t"], zeros, scales]
    if has_bias:
        in_specs.append(pl.BlockSpec((1, tile_n), lambda i, j, k: (0, j)))
        args.append(bias)

    out = pl.pallas_call(
        kernel,
        out_shape=jax.ShapeDtypeStruct((m_pad, N), out_dtype),
        grid_spec=pltpu.PrefetchScalarGridSpec(
            num_scalar_prefetch=0,
            grid=(m_pad // tile_m, N // tile_n, nkt),
            in_specs=in_specs,
            out_specs=pl.BlockSpec((tile_m, tile_n), lambda i, j, k: (i, j)),
            scratch_shapes=[pltpu.VMEM((tile_m, tile_n), jnp.float32)],
        ),
        compiler_params=pltpu.CompilerParams(
            dimension_semantics=("parallel", "parallel", "arbitrary"),
            vmem_limit_bytes=32 * 1024 * 1024,
        ),
    )(*args)

    if m_pad != M:
        out = out[:M]
    return out.reshape(*lead, N)


# --------------------------------------------------------------------------- reference
def _reference(x, wq, zeros_scales, bias, group_size=64):
    # Pure-JAX f32 reference of the same dequant + matmul semantics (original layout).
    N, kb = wq.shape
    K = kb * 2
    q = wq.astype(jnp.int32)
    hi = (q >> 4) & 0xF
    lo = q & 0xF
    q4 = jnp.stack([hi, lo], axis=-1).reshape(N, K).astype(jnp.float32)
    ng = K // group_size
    zs = zeros_scales.astype(jnp.float32).reshape(N, ng, 2)
    zero = jnp.repeat(zs[:, :, 0], group_size, axis=-1)
    scale = jnp.repeat(zs[:, :, 1], group_size, axis=-1)
    w = (q4 - zero) * scale
    y = jnp.einsum("bsk,nk->bsn", x.astype(jnp.float32), w)
    if bias is not None:
        y = y + bias.astype(jnp.float32)
    return y


if __name__ == "__main__":
    # WALinear(in_features=128, out_features=256, w_bit=4, group_size=64, bias=True):
    # weight (256, 128*4//8)=(256,64) uint8, zeros_scales (256, 128*2//64)=(256,4),
    # bias (1,256).  x: (batch=2, seq=4, 128).
    in_features, out_features, group_size = 128, 256, 64
    batch, seq = 2, 4

    key = jax.random.PRNGKey(0)
    kx, kw, kz, ks, kb = jax.random.split(key, 5)

    x = jax.random.normal(kx, (batch, seq, in_features), dtype=jnp.float32)
    x = x.astype(jnp.bfloat16)

    wq = jax.random.randint(
        kw, (out_features, in_features // 2), 0, 256, dtype=jnp.int32
    ).astype(jnp.uint8)

    ng = in_features // group_size
    zeros = jax.random.uniform(kz, (out_features, ng), minval=0.0, maxval=15.0)
    scales = jax.random.uniform(ks, (out_features, ng), minval=0.01, maxval=0.05)
    zeros_scales = (
        jnp.stack([zeros, scales], axis=-1).reshape(out_features, 2 * ng)
    ).astype(jnp.bfloat16)

    bias = (0.1 * jax.random.normal(kb, (1, out_features))).astype(jnp.bfloat16)

    # With bias.
    prepared = prepare_wa_weights(wq, zeros_scales, bias, group_size=group_size)
    y = jax.block_until_ready(wa_linear(x, prepared))
    y_ref = _reference(x, wq, zeros_scales, bias, group_size=group_size)
    assert y.shape == (batch, seq, out_features)
    assert y.dtype == jnp.bfloat16
    err = jnp.max(jnp.abs(y.astype(jnp.float32) - y_ref))
    rel = err / (jnp.max(jnp.abs(y_ref)) + 1e-6)
    assert rel < 2e-2, f"relative error too large (bias path): {rel}"

    # Without bias (exercises the bias-free kernel variant).
    prepared_nb = prepare_wa_weights(wq, zeros_scales, None, group_size=group_size)
    y_nb = jax.block_until_ready(wa_linear(x, prepared_nb))
    y_nb_ref = _reference(x, wq, zeros_scales, None, group_size=group_size)
    err_nb = jnp.max(jnp.abs(y_nb.astype(jnp.float32) - y_nb_ref))
    rel_nb = err_nb / (jnp.max(jnp.abs(y_nb_ref)) + 1e-6)
    assert rel_nb < 2e-2, f"relative error too large (no-bias path): {rel_nb}"

    print("KERNEL_OK")
</pallas_src>

<mosaic_0001>
module attributes {stable_mosaic.version = 11 : i64} {
  func.func @_wa_linear_kernel(%arg0: i32, %arg1: i32, %arg2: i32, %arg3: memref<16x128xbf16, #tpu.memory_space<vmem>>, %arg4: memref<16x128xbf16, #tpu.memory_space<vmem>>, %arg5: memref<128x256xi8, #tpu.memory_space<vmem>>, %arg6: memref<1x2x2x256xbf16, #tpu.memory_space<vmem>>, %arg7: memref<1x2x2x256xbf16, #tpu.memory_space<vmem>>, %arg8: memref<1x256xbf16, #tpu.memory_space<vmem>>, %arg9: memref<16x256xbf16, #tpu.memory_space<vmem>>, %arg10: memref<16x256xf32, #tpu.memory_space<vmem>>) attributes {dimension_semantics = [#tpu.dimension_semantics<parallel>, #tpu.dimension_semantics<parallel>, #tpu.dimension_semantics<arbitrary>], iteration_bounds = array<i64: 1, 1, 1>, scalar_prefetch = 0 : i64, scratch_operands = 1 : i64, tpu.core_type = #tpu.core_type<tc>, window_params = [{transform_indices = @transform_0, window_bounds = array<i64: 16, 128>}, {transform_indices = @transform_1, window_bounds = array<i64: 16, 128>}, {transform_indices = @transform_2, window_bounds = array<i64: 128, 256>}, {transform_indices = @transform_3, window_bounds = array<i64: 1, 2, 2, 256>}, {transform_indices = @transform_4, window_bounds = array<i64: 1, 2, 2, 256>}, {transform_indices = @transform_5, window_bounds = array<i64: 1, 256>}, {transform_indices = @transform_6, window_bounds = array<i64: 16, 256>}]} {
    %c0_i32 = arith.constant 0 : i32
    %0 = arith.cmpi eq, %arg2, %c0_i32 : i32
    %1 = arith.extui %0 : i1 to i32
    %c0_i32_0 = arith.constant 0 : i32
    %2 = arith.cmpi ne, %1, %c0_i32_0 : i32
    scf.if %2 {
      %cst_28 = arith.constant 0.000000e+00 : f32
      %46 = vector.broadcast %cst_28 : f32 to vector<16x256xf32>
      %c0_29 = arith.constant 0 : index
      %c0_30 = arith.constant 0 : index
      %47 = vector.load %arg10[%c0_29, %c0_30] : memref<16x256xf32, #tpu.memory_space<vmem>>, vector<16x256xf32>
      tpu.vector_store %arg10[%c0_29, %c0_30], %46 {strides = array<i32>} : memref<16x256xf32, #tpu.memory_space<vmem>>, vector<16x256xf32>,
    } else {
    }
    %c0 = arith.constant 0 : index
    %c0_1 = arith.constant 0 : index
    %3 = vector.load %arg5[%c0, %c0_1] : memref<128x256xi8, #tpu.memory_space<vmem>>, vector<128x256xi8>
    %4 = arith.extui %3 : vector<128x256xi8> to vector<128x256xi32>
    %c4_i32 = arith.constant 4 : i32
    %5 = vector.broadcast %c4_i32 : i32 to vector<128x256xi32>
    %6 = arith.shrsi %4, %5 : vector<128x256xi32>
    %7 = arith.sitofp %6 : vector<128x256xi32> to vector<128x256xbf16>
    %c15_i32 = arith.constant 15 : i32
    %8 = vector.broadcast %c15_i32 : i32 to vector<128x256xi32>
    %9 = arith.andi %4, %8 : vector<128x256xi32>
    %10 = arith.sitofp %9 : vector<128x256xi32> to vector<128x256xbf16>
    %c0_2 = arith.constant 0 : index
    %c0_3 = arith.constant 0 : index
    %c0_4 = arith.constant 0 : index
    %c0_5 = arith.constant 0 : index
    %11 = vector.load %arg6[%c0_2, %c0_3, %c0_4, %c0_5] : memref<1x2x2x256xbf16, #tpu.memory_space<vmem>>, vector<1x1x2x256xbf16>
    %12 = vector.shape_cast %11 : vector<1x1x2x256xbf16> to vector<2x256xbf16>
    %13 = vector.shape_cast %12 : vector<2x256xbf16> to vector<2x1x256xbf16>
    %14 = vector.broadcast %13 : vector<2x1x256xbf16> to vector<2x64x256xbf16>
    %15 = vector.shape_cast %14 : vector<2x64x256xbf16> to vector<128x256xbf16>
    %c0_6 = arith.constant 0 : index
    %c1 = arith.constant 1 : index
    %c0_7 = arith.constant 0 : index
    %c0_8 = arith.constant 0 : index
    %16 = vector.load %arg6[%c0_6, %c1, %c0_7, %c0_8] : memref<1x2x2x256xbf16, #tpu.memory_space<vmem>>, vector<1x1x2x256xbf16>
    %17 = vector.shape_cast %16 : vector<1x1x2x256xbf16> to vector<2x256xbf16>
    %18 = vector.shape_cast %17 : vector<2x256xbf16> to vector<2x1x256xbf16>
    %19 = vector.broadcast %18 : vector<2x1x256xbf16> to vector<2x64x256xbf16>
    %20 = vector.shape_cast %19 : vector<2x64x256xbf16> to vector<128x256xbf16>
    %c0_9 = arith.constant 0 : index
    %c0_10 = arith.constant 0 : index
    %c0_11 = arith.constant 0 : index
    %c0_12 = arith.constant 0 : index
    %21 = vector.load %arg7[%c0_9, %c0_10, %c0_11, %c0_12] : memref<1x2x2x256xbf16, #tpu.memory_space<vmem>>, vector<1x1x2x256xbf16>
    %22 = vector.shape_cast %21 : vector<1x1x2x256xbf16> to vector<2x256xbf16>
    %23 = vector.shape_cast %22 : vector<2x256xbf16> to vector<2x1x256xbf16>
    %24 = vector.broadcast %23 : vector<2x1x256xbf16> to vector<2x64x256xbf16>
    %25 = vector.shape_cast %24 : vector<2x64x256xbf16> to vector<128x256xbf16>
    %c0_13 = arith.constant 0 : index
    %c1_14 = arith.constant 1 : index
    %c0_15 = arith.constant 0 : index
    %c0_16 = arith.constant 0 : index
    %26 = vector.load %arg7[%c0_13, %c1_14, %c0_15, %c0_16] : memref<1x2x2x256xbf16, #tpu.memory_space<vmem>>, vector<1x1x2x256xbf16>
    %27 = vector.shape_cast %26 : vector<1x1x2x256xbf16> to vector<2x256xbf16>
    %28 = vector.shape_cast %27 : vector<2x256xbf16> to vector<2x1x256xbf16>
    %29 = vector.broadcast %28 : vector<2x1x256xbf16> to vector<2x64x256xbf16>
    %30 = vector.shape_cast %29 : vector<2x64x256xbf16> to vector<128x256xbf16>
    %31 = arith.subf %7, %15 : vector<128x256xbf16>
    %32 = arith.mulf %31, %25 : vector<128x256xbf16>
    %33 = arith.subf %10, %20 : vector<128x256xbf16>
    %34 = arith.mulf %33, %30 : vector<128x256xbf16>
    %c0_17 = arith.constant 0 : index
    %c0_18 = arith.constant 0 : index
    %35 = vector.load %arg10[%c0_17, %c0_18] : memref<16x256xf32, #tpu.memory_space<vmem>>, vector<16x256xf32>
    %c0_19 = arith.constant 0 : index
    %c0_20 = arith.constant 0 : index
    %36 = vector.load %arg3[%c0_19, %c0_20] : memref<16x128xbf16, #tpu.memory_space<vmem>>, vector<16x128xbf16>
    %cst = arith.constant dense<0.000000e+00> : vector<16x256xf32>
    %37 = tpu.matmul %36, %32, %cst {dimension_numbers = #tpu.dot_dimension_numbers<[1], [0], [0], [1], [0, 0, 1, 1], [], []>} : vector<16x128xbf16>, vector<128x256xbf16>, vector<16x256xf32> -> vector<16x256xf32>
    %c0_21 = arith.constant 0 : index
    %c0_22 = arith.constant 0 : index
    %38 = vector.load %arg4[%c0_21, %c0_22] : memref<16x128xbf16, #tpu.memory_space<vmem>>, vector<16x128xbf16>
    %cst_23 = arith.constant dense<0.000000e+00> : vector<16x256xf32>
    %39 = tpu.matmul %38, %34, %cst_23 {dimension_numbers = #tpu.dot_dimension_numbers<[1], [0], [0], [1], [0, 0, 1, 1], [], []>} : vector<16x128xbf16>, vector<128x256xbf16>, vector<16x256xf32> -> vector<16x256xf32>
    %40 = arith.addf %37, %39 : vector<16x256xf32>
    %41 = arith.addf %35, %40 : vector<16x256xf32>
    %c0_24 = arith.constant 0 : index
    %c0_25 = arith.constant 0 : index
    %42 = vector.load %arg10[%c0_24, %c0_25] : memref<16x256xf32, #tpu.memory_space<vmem>>, vector<16x256xf32>
    tpu.vector_store %arg10[%c0_24, %c0_25], %41 {strides = array<i32>} : memref<16x256xf32, #tpu.memory_space<vmem>>, vector<16x256xf32>,
    %c0_i32_26 = arith.constant 0 : i32
    %43 = arith.cmpi eq, %arg2, %c0_i32_26 : i32
    %44 = arith.extui %43 : i1 to i32
    %c0_i32_27 = arith.constant 0 : i32
    %45 = arith.cmpi ne, %44, %c0_i32_27 : i32
    scf.if %45 {
      %c0_28 = arith.constant 0 : index
      %c0_29 = arith.constant 0 : index
      %46 = vector.load %arg10[%c0_28, %c0_29] : memref<16x256xf32, #tpu.memory_space<vmem>>, vector<16x256xf32>
      %c0_30 = arith.constant 0 : index
      %c0_31 = arith.constant 0 : index
      %47 = vector.load %arg8[%c0_30, %c0_31] : memref<1x256xbf16, #tpu.memory_space<vmem>>, vector<1x256xbf16>
      %48 = arith.extf %47 : vector<1x256xbf16> to vector<1x256xf32>
      %49 = vector.broadcast %48 : vector<1x256xf32> to vector<16x256xf32>
      %50 = arith.addf %46, %49 : vector<16x256xf32>
      %51 = arith.truncf %50 : vector<16x256xf32> to vector<16x256xbf16>
      %c0_32 = arith.constant 0 : index
      %c0_33 = arith.constant 0 : index
      %52 = vector.load %arg9[%c0_32, %c0_33] : memref<16x256xbf16, #tpu.memory_space<vmem>>, vector<16x256xbf16>
      tpu.vector_store %arg9[%c0_32, %c0_33], %51 {strides = array<i32>} : memref<16x256xbf16, #tpu.memory_space<vmem>>, vector<16x256xbf16>,
    } else {
    }
    return
  }
  func.func @transform_0(%arg0: i32, %arg1: i32, %arg2: i32) -> (i32, i32) {
    %c0_i32 = arith.constant 0 : i32
    return %arg0, %arg2 : i32, i32
  }
  func.func @transform_1(%arg0: i32, %arg1: i32, %arg2: i32) -> (i32, i32) {
    %c1_i32 = arith.constant 1 : i32
    %0 = arith.addi %arg2, %c1_i32 : i32
    %c0_i32 = arith.constant 0 : i32
    return %arg0, %0 : i32, i32
  }
  func.func @transform_2(%arg0: i32, %arg1: i32, %arg2: i32) -> (i32, i32) {
    %c0_i32 = arith.constant 0 : i32
    return %arg2, %arg1 : i32, i32
  }
  func.func @transform_3(%arg0: i32, %arg1: i32, %arg2: i32) -> (i32, i32, i32, i32) {
    %c0_i32 = arith.constant 0 : i32
    %c0_i32_0 = arith.constant 0 : i32
    %c0_i32_1 = arith.constant 0 : i32
    return %arg2, %c0_i32, %c0_i32_0, %arg1 : i32, i32, i32, i32
  }
  func.func @transform_4(%arg0: i32, %arg1: i32, %arg2: i32) -> (i32, i32, i32, i32) {
    %c0_i32 = arith.constant 0 : i32
    %c0_i32_0 = arith.constant 0 : i32
    %c0_i32_1 = arith.constant 0 : i32
    return %arg2, %c0_i32, %c0_i32_0, %arg1 : i32, i32, i32, i32
  }
  func.func @transform_5(%arg0: i32, %arg1: i32, %arg2: i32) -> (i32, i32) {
    %c0_i32 = arith.constant 0 : i32
    %c0_i32_0 = arith.constant 0 : i32
    return %c0_i32, %arg1 : i32, i32
  }
  func.func @transform_6(%arg0: i32, %arg1: i32, %arg2: i32) -> (i32, i32) {
    %c0_i32 = arith.constant 0 : i32
    return %arg0, %arg1 : i32, i32
  }
}

</mosaic_0001>

<llo_original>
// kernel: tpu_custom_call.1
$region0: #{tpu_custom_call.1}
  #allocation0 [shape = 'u32[]', space=smem, size = 0x4, offset = 0x4, fixed_abs, tag = 'smem constant byte address 0x4 - core index']
  #allocation1 [shape = 'u32[144,128]{1,0:T(1,128)}', space=vmem, size = 0x12000, scoped, tag = 'internal scratch']
  #allocation2 [shape = 'f32[16,256]{1,0:T(8,128)}', space=vmem, size = 0x4000, scoped, tag = 'scratch operand']
  %s0 = inlined_call_operand.hbm [shape: bf16[16,256], index: 0, kind: input, shape index: {}]
  %s1 = inlined_call_operand.hbm [shape: bf16[16,256], index: 1, kind: input, shape index: {}]
  %s2 = inlined_call_operand.hbm [shape: u8[128,256], index: 2, kind: input, shape index: {}]
  %s3 = inlined_call_operand.vmem [shape: bf16[1,2,2,256], index: 3, kind: input, shape index: {}]
  %s4 = inlined_call_operand.vmem [shape: bf16[1,2,2,256], index: 4, kind: input, shape index: {}]
  %s5 = inlined_call_operand.vmem [shape: bf16[1,256], index: 5, kind: input, shape index: {}]
  %s6 = inlined_call_operand.hbm [shape: bf16[16,256], index: 6, kind: output, shape index: {}]
  %s7 = sld [smem:[#allocation0]]
  $region54: #{tpu_custom_call.1} parent=0
    _
  %s9 = ssub.s32 1, %s7
  %s10 = scalar_select 0, %s9, %s7
  $region1: #{tpu_custom_call.1} parent=0
    #allocation3 [shape = 'u8[4096]{0}', space=vmem, size = 0x1000, scoped, tag = 'input window, operand 0, single buffered']
    #allocation4 [shape = 's32[1]{0}', space=sflag, size = 0x4, scoped, tag = 'scoped memory for tpu_custom_call.1']
    #allocation5 [shape = 's32[1]{0}', space=sflag, size = 0x4, scoped, tag = 'scoped memory for tpu_custom_call.1']
    #allocation6 [shape = 'u8[4096]{0}', space=vmem, size = 0x1000, scoped, tag = 'input window, operand 1, single buffered']
    #allocation7 [shape = 's32[1]{0}', space=sflag, size = 0x4, scoped, tag = 'scoped memory for tpu_custom_call.1']
    #allocation8 [shape = 'u8[32768]{0}', space=vmem, size = 0x8000, scoped, tag = 'input window, operand 2, single buffered']
    #allocation9 [shape = 'u8[8192]{0}', space=vmem, size = 0x2000, scoped, tag = 'output window, operand 0, single buffered']
    %11 = vsyncpa [#allocation4], 0
    %12 = vsyncpa [#allocation7], 0
    %13 = vsyncpa [#allocation5], 0
    // Predicated region
    $region2: #{tpu_custom_call.1} parent=1 // pred_check
      _
    $region3: #{tpu_custom_call.1} parent=1 // pred_check_branch
      %15 = sbr.rel (0) target = $region5
    $region4: #{tpu_custom_call.1} parent=1 // pred_region
      %s17 = ssub.s32 128, 128
      %18 = vsyncadd [#allocation4], %s17
      %s19 = sshll.u32 [#allocation3], 4
      %s20 = int_to_ptr.vmem [resolvable:$true] %s19
      %25 = dma.hbm_to_vmem [thread:$0]  %s0, 128, %s20, [#allocation4], 128, 64, 4
    $region5: #{tpu_custom_call.1} parent=1 // pred_fallthru
      _
    // Predicated region
    $region6: #{tpu_custom_call.1} parent=1 // pred_check
      _
    $region7: #{tpu_custom_call.1} parent=1 // pred_check_branch
      %27 = sbr.rel (0) target = $region9
    $region8: #{tpu_custom_call.1} parent=1 // pred_region
      %s28 = sadd.s32 0, 1
      %s30 = ssub.s32 128, 128
      %31 = vsyncadd [#allocation7], %s30
      %s32 = smul.addr %s28, 64
      %s33 = scalar_lea.hbm %s1, %s32
      %s34 = sshll.u32 [#allocation6], 4
      %s35 = int_to_ptr.vmem [resolvable:$true] %s34
      %40 = dma.hbm_to_vmem [thread:$0]  %s33, 128, %s35, [#allocation7], 128, 64, 4
    $region9: #{tpu_custom_call.1} parent=1 // pred_fallthru
      _
    // Predicated region
    $region10: #{tpu_custom_call.1} parent=1 // pred_check
      _
    $region11: #{tpu_custom_call.1} parent=1 // pred_check_branch
      %42 = sbr.rel (0) target = $region13
    $region12: #{tpu_custom_call.1} parent=1 // pred_region
      %s44 = ssub.s32 1024, 1024
      %45 = vsyncadd [#allocation7], %s44
      %s46 = sshll.u32 [#allocation8], 4
      %s47 = int_to_ptr.vmem [resolvable:$true] %s46
      %52 = dma.hbm_to_vmem [thread:$0]  %s2, 1024, %s47, [#allocation7], 256, 256, 16
    $region13: #{tpu_custom_call.1} parent=1 // pred_fallthru
      _
    // Predicated region
    $region14: #{tpu_custom_call.1} parent=1 // pred_check
      _
    $region15: #{tpu_custom_call.1} parent=1 // pred_check_branch
      %54 = sbr.rel (0) target = $region17
    $region16: #{tpu_custom_call.1} parent=1 // pred_region
      _
    $region17: #{tpu_custom_call.1} parent=1 // pred_fallthru
      _
    // Predicated region
    $region18: #{tpu_custom_call.1} parent=1 // pred_check
      _
    $region19: #{tpu_custom_call.1} parent=1 // pred_check_branch
      %56 = sbr.rel (0) target = $region21
    $region20: #{tpu_custom_call.1} parent=1 // pred_region
      _
    $region21: #{tpu_custom_call.1} parent=1 // pred_fallthru
      _
    // Predicated region
    $region22: #{tpu_custom_call.1} parent=1 // pred_check
      _
    $region23: #{tpu_custom_call.1} parent=1 // pred_check_branch
      %58 = sbr.rel (0) target = $region25
    $region24: #{tpu_custom_call.1} parent=1 // pred_region
      _
    $region25: #{tpu_custom_call.1} parent=1 // pred_fallthru
      _
    // Predicated region
    $region26: #{tpu_custom_call.1} parent=1 // pred_check
      _
    $region27: #{tpu_custom_call.1} parent=1 // pred_check_branch
      %60 = sbr.rel (0) target = $region29
    $region28: #{tpu_custom_call.1} parent=1 // pred_region
      %61 = dma.done [#allocation4], 128
    $region29: #{tpu_custom_call.1} parent=1 // pred_fallthru
      _
    // Predicated region
    $region30: #{tpu_custom_call.1} parent=1 // pred_check
      _
    $region31: #{tpu_custom_call.1} parent=1 // pred_check_branch
      %63 = sbr.rel (0) target = $region33
    $region32: #{tpu_custom_call.1} parent=1 // pred_region
      %64 = dma.done [#allocation7], 128
    $region33: #{tpu_custom_call.1} parent=1 // pred_fallthru
      _
    // Predicated region
    $region34: #{tpu_custom_call.1} parent=1 // pred_check
      _
    $region35: #{tpu_custom_call.1} parent=1 // pred_check_branch
      %66 = sbr.rel (0) target = $region37
    $region36: #{tpu_custom_call.1} parent=1 // pred_region
      %67 = dma.done [#allocation7], 1024
    $region37: #{tpu_custom_call.1} parent=1 // pred_fallthru
      _
    %s68 = sadd.s32 0, 1
    %p70 = scmp.eq.s32.totalorder 0, 0
    // Predicated region
    $region38: #{tpu_custom_call.1} parent=1 // pred_check
      %p71 = pneg %p70
    $region39: #{tpu_custom_call.1} parent=1 // pred_check_branch
      %73 = sbr.rel (%p71) target = $region41
    $region40: #{tpu_custom_call.1} parent=1 // pred_region
      %74 = vst [vmem:[#allocation2] sm:$0xff] 0.0
      %75 = vst [vmem:[#allocation2 + $0x8] sm:$0xff] 0.0
      %76 = vst [vmem:[#allocation2 + $0x10] sm:$0xff] 0.0
      %77 = vst [vmem:[#allocation2 + $0x18] sm:$0xff] 0.0
    $region41: #{tpu_custom_call.1} parent=1 // pred_fallthru
      _
    %v78 = vld [vmem:[#allocation8] sm:$0xff]
    %v79 = vld [vmem:[#allocation8 + $0x8] sm:$0xff]
    %v80 = vld [vmem:[#allocation8 + $0x10] sm:$0xff]
    %v81 = vld [vmem:[#allocation8 + $0x18] sm:$0xff]
    %v82 = vld [vmem:[#allocation8 + $0x20] sm:$0xff]
    %v83 = vld [vmem:[#allocation8 + $0x28] sm:$0xff]
    %v84 = vld [vmem:[#allocation8 + $0x30] sm:$0xff]
    %v85 = vld [vmem:[#allocation8 + $0x38] sm:$0xff]
    %v86 = vunpack.c.0.s8 %v78
    %v87 = vunpack.c.0.s8 %v79
    %v88 = vunpack.c.1.s8 %v78
    %v89 = vunpack.c.1.s8 %v79
    %v90 = vunpack.c.2.s8 %v78
    %v91 = vunpack.c.2.s8 %v79
    %v92 = vunpack.c.3.s8 %v78
    %v93 = vunpack.c.3.s8 %v79
    %v94 = vunpack.c.0.s8 %v80
    %v95 = vunpack.c.0.s8 %v81
    %v96 = vunpack.c.1.s8 %v80
    %v97 = vunpack.c.1.s8 %v81
    %v98 = vunpack.c.2.s8 %v80
    %v99 = vunpack.c.2.s8 %v81
    %v100 = vunpack.c.3.s8 %v80
    %v101 = vunpack.c.3.s8 %v81
    %v102 = vunpack.c.0.s8 %v82
    %v103 = vunpack.c.0.s8 %v83
    %v104 = vunpack.c.1.s8 %v82
    %v105 = vunpack.c.1.s8 %v83
    %v106 = vunpack.c.2.s8 %v82
    %v107 = vunpack.c.2.s8 %v83
    %v108 = vunpack.c.3.s8 %v82
    %v109 = vunpack.c.3.s8 %v83
    %v110 = vunpack.c.0.s8 %v84
    %v111 = vunpack.c.0.s8 %v85
    %v112 = vunpack.c.1.s8 %v84
    %v113 = vunpack.c.1.s8 %v85
    %v114 = vunpack.c.2.s8 %v84
    %v115 = vunpack.c.2.s8 %v85
    %v116 = vunpack.c.3.s8 %v84
    %v117 = vunpack.c.3.s8 %v85
    %v118 = vand.u32 %v86, 255
    %v119 = vand.u32 %v87, 255
    %v120 = vand.u32 %v88, 255
    %v121 = vand.u32 %v89, 255
    %v122 = vand.u32 %v90, 255
    %v123 = vand.u32 %v91, 255
    %v124 = vand.u32 %v92, 255
    %v125 = vand.u32 %v93, 255
    %v126 = vand.u32 %v94, 255
    %v127 = vand.u32 %v95, 255
    %v128 = vand.u32 %v96, 255
    %v129 = vand.u32 %v97, 255
    %v130 = vand.u32 %v98, 255
    %v131 = vand.u32 %v99, 255
    %v132 = vand.u32 %v100, 255
    %v133 = vand.u32 %v101, 255
    %v134 = vand.u32 %v102, 255
    %v135 = vand.u32 %v103, 255
    %v136 = vand.u32 %v104, 255
    %v137 = vand.u32 %v105, 255
    %v138 = vand.u32 %v106, 255
    %v139 = vand.u32 %v107, 255
    %v140 = vand.u32 %v108, 255
    %v141 = vand.u32 %v109, 255
    %v142 = vand.u32 %v110, 255
    %v143 = vand.u32 %v111, 255
    %v144 = vand.u32 %v112, 255
    %v145 = vand.u32 %v113, 255
    %v146 = vand.u32 %v114, 255
    %v147 = vand.u32 %v115, 255
    %v148 = vand.u32 %v116, 255
    %v149 = vand.u32 %v117, 255
    %v150 = vshra.s32 %v118, 4
    %v151 = vshra.s32 %v119, 4
    %v152 = vshra.s32 %v120, 4
    %v153 = vshra.s32 %v121, 4
    %v154 = vshra.s32 %v122, 4
    %v155 = vshra.s32 %v123, 4
    %v156 = vshra.s32 %v124, 4
    %v157 = vshra.s32 %v125, 4
    %v158 = vshra.s32 %v126, 4
    %v159 = vshra.s32 %v127, 4
    %v160 = vshra.s32 %v128, 4
    %v161 = vshra.s32 %v129, 4
    %v162 = vshra.s32 %v130, 4
    %v163 = vshra.s32 %v131, 4
    %v164 = vshra.s32 %v132, 4
    %v165 = vshra.s32 %v133, 4
    %v166 = vshra.s32 %v134, 4
    %v167 = vshra.s32 %v135, 4
    %v168 = vshra.s32 %v136, 4
    %v169 = vshra.s32 %v137, 4
    %v170 = vshra.s32 %v138, 4
    %v171 = vshra.s32 %v139, 4
    %v172 = vshra.s32 %v140, 4
    %v173 = vshra.s32 %v141, 4
    %v174 = vshra.s32 %v142, 4
    %v175 = vshra.s32 %v143, 4
    %v176 = vshra.s32 %v144, 4
    %v177 = vshra.s32 %v145, 4
    %v178 = vshra.s32 %v146, 4
    %v179 = vshra.s32 %v147, 4
    %v180 = vshra.s32 %v148, 4
    %v181 = vshra.s32 %v149, 4
    %v182 = vcvt.s32.f32 %v150
    %v183 = vcvt.s32.f32 %v151
    %v184 = vcvt.s32.f32 %v152
    %v185 = vcvt.s32.f32 %v153
    %v186 = vcvt.s32.f32 %v154
    %v187 = vcvt.s32.f32 %v155
    %v188 = vcvt.s32.f32 %v156
    %v189 = vcvt.s32.f32 %v157
    %v190 = vcvt.s32.f32 %v158
    %v191 = vcvt.s32.f32 %v159
    %v192 = vcvt.s32.f32 %v160
    %v193 = vcvt.s32.f32 %v161
    %v194 = vcvt.s32.f32 %v162
    %v195 = vcvt.s32.f32 %v163
    %v196 = vcvt.s32.f32 %v164
    %v197 = vcvt.s32.f32 %v165
    %v198 = vcvt.s32.f32 %v166
    %v199 = vcvt.s32.f32 %v167
    %v200 = vcvt.s32.f32 %v168
    %v201 = vcvt.s32.f32 %v169
    %v202 = vcvt.s32.f32 %v170
    %v203 = vcvt.s32.f32 %v171
    %v204 = vcvt.s32.f32 %v172
    %v205 = vcvt.s32.f32 %v173
    %v206 = vcvt.s32.f32 %v174
    %v207 = vcvt.s32.f32 %v175
    %v208 = vcvt.s32.f32 %v176
    %v209 = vcvt.s32.f32 %v177
    %v210 = vcvt.s32.f32 %v178
    %v211 = vcvt.s32.f32 %v179
    %v212 = vcvt.s32.f32 %v180
    %v213 = vcvt.s32.f32 %v181
    %v214 = vpack.c.bf16 %v184, %v182
    %v215 = vpack.c.bf16 %v185, %v183
    %v216 = vpack.c.bf16 %v188, %v186
    %v217 = vpack.c.bf16 %v189, %v187
    %v218 = vpack.c.bf16 %v192, %v190
    %v219 = vpack.c.bf16 %v193, %v191
    %v220 = vpack.c.bf16 %v196, %v194
    %v221 = vpack.c.bf16 %v197, %v195
    %v222 = vpack.c.bf16 %v200, %v198
    %v223 = vpack.c.bf16 %v201, %v199
    %v224 = vpack.c.bf16 %v204, %v202
    %v225 = vpack.c.bf16 %v205, %v203
    %v226 = vpack.c.bf16 %v208, %v206
    %v227 = vpack.c.bf16 %v209, %v207
    %v228 = vpack.c.bf16 %v212, %v210
    %v229 = vpack.c.bf16 %v213, %v211
    %v230 = vand.u32 %v118, 15
    %v231 = vand.u32 %v119, 15
    %v232 = vand.u32 %v120, 15
    %v233 = vand.u32 %v121, 15
    %v234 = vand.u32 %v122, 15
    %v235 = vand.u32 %v123, 15
    %v236 = vand.u32 %v124, 15
    %v237 = vand.u32 %v125, 15
    %v238 = vand.u32 %v126, 15
    %v239 = vand.u32 %v127, 15
    %v240 = vand.u32 %v128, 15
    %v241 = vand.u32 %v129, 15
    %v242 = vand.u32 %v130, 15
    %v243 = vand.u32 %v131, 15
    %v244 = vand.u32 %v132, 15
    %v245 = vand.u32 %v133, 15
    %v246 = vand.u32 %v134, 15
    %v247 = vand.u32 %v135, 15
    %v248 = vand.u32 %v136, 15
    %v249 = vand.u32 %v137, 15
    %v250 = vand.u32 %v138, 15
    %v251 = vand.u32 %v139, 15
    %v252 = vand.u32 %v140, 15
    %v253 = vand.u32 %v141, 15
    %v254 = vand.u32 %v142, 15
    %v255 = vand.u32 %v143, 15
    %v256 = vand.u32 %v144, 15
    %v257 = vand.u32 %v145, 15
    %v258 = vand.u32 %v146, 15
    %v259 = vand.u32 %v147, 15
    %v260 = vand.u32 %v148, 15
    %v261 = vand.u32 %v149, 15
    %v262 = vcvt.s32.f32 %v230
    %v263 = vcvt.s32.f32 %v231
    %v264 = vcvt.s32.f32 %v232
    %v265 = vcvt.s32.f32 %v233
    %v266 = vcvt.s32.f32 %v234
    %v267 = vcvt.s32.f32 %v235
    %v268 = vcvt.s32.f32 %v236
    %v269 = vcvt.s32.f32 %v237
    %v270 = vcvt.s32.f32 %v238
    %v271 = vcvt.s32.f32 %v239
    %v272 = vcvt.s32.f32 %v240
    %v273 = vcvt.s32.f32 %v241
    %v274 = vcvt.s32.f32 %v242
    %v275 = vcvt.s32.f32 %v243
    %v276 = vcvt.s32.f32 %v244
    %v277 = vcvt.s32.f32 %v245
    %v278 = vcvt.s32.f32 %v246
    %v279 = vcvt.s32.f32 %v247
    %v280 = vcvt.s32.f32 %v248
    %v281 = vcvt.s32.f32 %v249
    %v282 = vcvt.s32.f32 %v250
    %v283 = vcvt.s32.f32 %v251
    %v284 = vcvt.s32.f32 %v252
    %v285 = vcvt.s32.f32 %v253
    %v286 = vcvt.s32.f32 %v254
    %v287 = vcvt.s32.f32 %v255
    %v288 = vcvt.s32.f32 %v256
    %v289 = vcvt.s32.f32 %v257
    %v290 = vcvt.s32.f32 %v258
    %v291 = vcvt.s32.f32 %v259
    %v292 = vcvt.s32.f32 %v260
    %v293 = vcvt.s32.f32 %v261
    %v294 = vpack.c.bf16 %v264, %v262
    %v295 = vpack.c.bf16 %v265, %v263
    %v296 = vpack.c.bf16 %v268, %v266
    %v297 = vpack.c.bf16 %v269, %v267
    %v298 = vpack.c.bf16 %v272, %v270
    %v299 = vpack.c.bf16 %v273, %v271
    %v300 = vpack.c.bf16 %v276, %v274
    %v301 = vpack.c.bf16 %v277, %v275
    %v302 = vpack.c.bf16 %v280, %v278
    %v303 = vpack.c.bf16 %v281, %v279
    %v304 = vpack.c.bf16 %v284, %v282
    %v305 = vpack.c.bf16 %v285, %v283
    %v306 = vpack.c.bf16 %v288, %v286
    %v307 = vpack.c.bf16 %v289, %v287
    %v308 = vpack.c.bf16 %v292, %v290
    %v309 = vpack.c.bf16 %v293, %v291
    %v310 = vld [vmem:[%s3] sm:$0x3]
    %v312 = vunpack.i.l.s16 %v310
    %v313 = vunpack.i.h.s16 %v310
    %v314 = vpack.i.b16 %v312, %v312
    %v315 = vpack.i.b16 %v313, %v313
    %v316 = vlaneseq
    %v317 = vshrl.u32 %v316, 7
    %v318 = vsub.s32 0, %v317
    %v319 = vrot.slane %v314, %v318
    %v320 = vlaneseq
    %v321 = vshrl.u32 %v320, 7
    %v322 = vsub.s32 1, %v321
    %v323 = vrot.slane %v314, %v322
    %v324 = vlaneseq
    %v325 = vshrl.u32 %v324, 7
    %v326 = vsub.s32 0, %v325
    %v327 = vrot.slane %v315, %v326
    %v328 = vlaneseq
    %v329 = vshrl.u32 %v328, 7
    %v330 = vsub.s32 1, %v329
    %v331 = vrot.slane %v315, %v330
    %v333 = vpack.i.b16 %v319, %v319
    %v335 = vlaneseq
    %v336 = vshrl.u32 %v335, 7
    %v337 = vsub.s32 0, %v336
    %v338 = vrot.slane %v333, %v337
    %v340 = vpack.i.b16 %v323, %v323
    %v342 = vlaneseq
    %v343 = vshrl.u32 %v342, 7
    %v344 = vsub.s32 0, %v343
    %v345 = vrot.slane %v340, %v344
    %v347 = vpack.i.b16 %v327, %v327
    %v349 = vlaneseq
    %v350 = vshrl.u32 %v349, 7
    %v351 = vsub.s32 0, %v350
    %v352 = vrot.slane %v347, %v351
    %v354 = vpack.i.b16 %v331, %v331
    %v356 = vlaneseq
    %v357 = vshrl.u32 %v356, 7
    %v358 = vsub.s32 0, %v357
    %v359 = vrot.slane %v354, %v358
    %s360 = scalar_lea.vmem %s3, 2
    %v361 = vld [vmem:[%s360] sm:$0x3]
    %v363 = vunpack.i.l.s16 %v361
    %v364 = vunpack.i.h.s16 %v361
    %v365 = vpack.i.b16 %v363, %v363
    %v366 = vpack.i.b16 %v364, %v364
    %v367 = vlaneseq
    %v368 = vshrl.u32 %v367, 7
    %v369 = vsub.s32 0, %v368
    %v370 = vrot.slane %v365, %v369
    %v371 = vlaneseq
    %v372 = vshrl.u32 %v371, 7
    %v373 = vsub.s32 1, %v372
    %v374 = vrot.slane %v365, %v373
    %v375 = vlaneseq
    %v376 = vshrl.u32 %v375, 7
    %v377 = vsub.s32 0, %v376
    %v378 = vrot.slane %v366, %v377
    %v379 = vlaneseq
    %v380 = vshrl.u32 %v379, 7
    %v381 = vsub.s32 1, %v380
    %v382 = vrot.slane %v366, %v381
    %v384 = vpack.i.b16 %v370, %v370
    %v386 = vlaneseq
    %v387 = vshrl.u32 %v386, 7
    %v388 = vsub.s32 0, %v387
    %v389 = vrot.slane %v384, %v388
    %v391 = vpack.i.b16 %v374, %v374
    %v393 = vlaneseq
    %v394 = vshrl.u32 %v393, 7
    %v395 = vsub.s32 0, %v394
    %v396 = vrot.slane %v391, %v395
    %v398 = vpack.i.b16 %v378, %v378
    %v400 = vlaneseq
    %v401 = vshrl.u32 %v400, 7
    %v402 = vsub.s32 0, %v401
    %v403 = vrot.slane %v398, %v402
    %v405 = vpack.i.b16 %v382, %v382
    %v407 = vlaneseq
    %v408 = vshrl.u32 %v407, 7
    %v409 = vsub.s32 0, %v408
    %v410 = vrot.slane %v405, %v409
    %v411 = vld [vmem:[%s4] sm:$0x3]
    %v413 = vunpack.i.l.s16 %v411
    %v414 = vunpack.i.h.s16 %v411
    %v415 = vpack.i.b16 %v413, %v413
    %v416 = vpack.i.b16 %v414, %v414
    %v417 = vlaneseq
    %v418 = vshrl.u32 %v417, 7
    %v419 = vsub.s32 0, %v418
    %v420 = vrot.slane %v415, %v419
    %v421 = vlaneseq
    %v422 = vshrl.u32 %v421, 7
    %v423 = vsub.s32 1, %v422
    %v424 = vrot.slane %v415, %v423
    %v425 = vlaneseq
    %v426 = vshrl.u32 %v425, 7
    %v427 = vsub.s32 0, %v426
    %v428 = vrot.slane %v416, %v427
    %v429 = vlaneseq
    %v430 = vshrl.u32 %v429, 7
    %v431 = vsub.s32 1, %v430
    %v432 = vrot.slane %v416, %v431
    %v434 = vpack.i.b16 %v420, %v420
    %v436 = vlaneseq
    %v437 = vshrl.u32 %v436, 7
    %v438 = vsub.s32 0, %v437
    %v439 = vrot.slane %v434, %v438
    %v441 = vpack.i.b16 %v424, %v424
    %v443 = vlaneseq
    %v444 = vshrl.u32 %v443, 7
    %v445 = vsub.s32 0, %v444
    %v446 = vrot.slane %v441, %v445
    %v448 = vpack.i.b16 %v428, %v428
    %v450 = vlaneseq
    %v451 = vshrl.u32 %v450, 7
    %v452 = vsub.s32 0, %v451
    %v453 = vrot.slane %v448, %v452
    %v455 = vpack.i.b16 %v432, %v432
    %v457 = vlaneseq
    %v458 = vshrl.u32 %v457, 7
    %v459 = vsub.s32 0, %v458
    %v460 = vrot.slane %v455, %v459
    %s461 = scalar_lea.vmem %s4, 2
    %v462 = vld [vmem:[%s461] sm:$0x3]
    %v464 = vunpack.i.l.s16 %v462
    %v465 = vunpack.i.h.s16 %v462
    %v466 = vpack.i.b16 %v464, %v464
    %v467 = vpack.i.b16 %v465, %v465
    %v468 = vlaneseq
    %v469 = vshrl.u32 %v468, 7
    %v470 = vsub.s32 0, %v469
    %v471 = vrot.slane %v466, %v470
    %v472 = vlaneseq
    %v473 = vshrl.u32 %v472, 7
    %v474 = vsub.s32 1, %v473
    %v475 = vrot.slane %v466, %v474
    %v476 = vlaneseq
    %v477 = vshrl.u32 %v476, 7
    %v478 = vsub.s32 0, %v477
    %v479 = vrot.slane %v467, %v478
    %v480 = vlaneseq
    %v481 = vshrl.u32 %v480, 7
    %v482 = vsub.s32 1, %v481
    %v483 = vrot.slane %v467, %v482
    %v485 = vpack.i.b16 %v471, %v471
    %v487 = vlaneseq
    %v488 = vshrl.u32 %v487, 7
    %v489 = vsub.s32 0, %v488
    %v490 = vrot.slane %v485, %v489
    %v492 = vpack.i.b16 %v475, %v475
    %v494 = vlaneseq
    %v495 = vshrl.u32 %v494, 7
    %v496 = vsub.s32 0, %v495
    %v497 = vrot.slane %v492, %v496
    %v499 = vpack.i.b16 %v479, %v479
    %v501 = vlaneseq
    %v502 = vshrl.u32 %v501, 7
    %v503 = vsub.s32 0, %v502
    %v504 = vrot.slane %v499, %v503
    %v506 = vpack.i.b16 %v483, %v483
    %v508 = vlaneseq
    %v509 = vshrl.u32 %v508, 7
    %v510 = vsub.s32 0, %v509
    %v511 = vrot.slane %v506, %v510
    %v512 = vsub.bf16 %v214, %v338
    %v513 = vsub.bf16 %v215, %v345
    %v514 = vsub.bf16 %v216, %v338
    %v515 = vsub.bf16 %v217, %v345
    %v516 = vsub.bf16 %v218, %v338
    %v517 = vsub.bf16 %v219, %v345
    %v518 = vsub.bf16 %v220, %v338
    %v519 = vsub.bf16 %v221, %v345
    %v520 = vsub.bf16 %v222, %v352
    %v521 = vsub.bf16 %v223, %v359
    %v522 = vsub.bf16 %v224, %v352
    %v523 = vsub.bf16 %v225, %v359
    %v524 = vsub.bf16 %v226, %v352
    %v525 = vsub.bf16 %v227, %v359
    %v526 = vsub.bf16 %v228, %v352
    %v527 = vsub.bf16 %v229, %v359
    %v528 = vmul.bf16 %v512, %v439
    %v529 = vmul.bf16 %v513, %v446
    %v530 = vmul.bf16 %v514, %v439
    %v531 = vmul.bf16 %v515, %v446
    %v532 = vmul.bf16 %v516, %v439
    %v533 = vmul.bf16 %v517, %v446
    %v534 = vmul.bf16 %v518, %v439
    %v535 = vmul.bf16 %v519, %v446
    %v536 = vmul.bf16 %v520, %v453
    %v537 = vmul.bf16 %v521, %v460
    %v538 = vmul.bf16 %v522, %v453
    %v539 = vmul.bf16 %v523, %v460
    %v540 = vmul.bf16 %v524, %v453
    %v541 = vmul.bf16 %v525, %v460
    %v542 = vmul.bf16 %v526, %v453
    %v543 = vmul.bf16 %v527, %v460
    %v544 = vsub.bf16 %v294, %v389
    %v545 = vsub.bf16 %v295, %v396
    %v546 = vsub.bf16 %v296, %v389
    %v547 = vsub.bf16 %v297, %v396
    %v548 = vsub.bf16 %v298, %v389
    %v549 = vsub.bf16 %v299, %v396
    %v550 = vsub.bf16 %v300, %v389
    %v551 = vsub.bf16 %v301, %v396
    %v552 = vsub.bf16 %v302, %v403
    %v553 = vsub.bf16 %v303, %v410
    %v554 = vsub.bf16 %v304, %v403
    %v555 = vsub.bf16 %v305, %v410
    %v556 = vsub.bf16 %v306, %v403
    %v557 = vsub.bf16 %v307, %v410
    %v558 = vsub.bf16 %v308, %v403
    %v559 = vsub.bf16 %v309, %v410
    %v560 = vmul.bf16 %v544, %v490
    %v561 = vmul.bf16 %v545, %v497
    %v562 = vmul.bf16 %v546, %v490
    %v563 = vmul.bf16 %v547, %v497
    %v564 = vmul.bf16 %v548, %v490
    %v565 = vmul.bf16 %v549, %v497
    %v566 = vmul.bf16 %v550, %v490
    %v567 = vmul.bf16 %v551, %v497
    %v568 = vmul.bf16 %v552, %v504
    %v569 = vmul.bf16 %v553, %v511
    %v570 = vmul.bf16 %v554, %v504
    %v571 = vmul.bf16 %v555, %v511
    %v572 = vmul.bf16 %v556, %v504
    %v573 = vmul.bf16 %v557, %v511
    %v574 = vmul.bf16 %v558, %v504
    %v575 = vmul.bf16 %v559, %v511
    %v576 = vld [vmem:[#allocation2] sm:$0xff]
    %v577 = vld [vmem:[#allocation2 + $0x8] sm:$0xff]
    %v578 = vld [vmem:[#allocation2 + $0x10] sm:$0xff]
    %v579 = vld [vmem:[#allocation2 + $0x18] sm:$0xff]
    %v580 = vld [vmem:[#allocation3] sm:$0xf]
    %v581 = vld [vmem:[#allocation3 + $0x4] sm:$0xf]
    %v582 = vld [vmem:[#allocation6] sm:$0xf]
    %v583 = vld [vmem:[#allocation6 + $0x4] sm:$0xf]
    %v586 = vunpack.c.l.b16 %v582
    %v587 = vunpack.c.l.b16 %v583
    %v588 = vpack.c.b16 %v587, %v586
    %590 = vmatprep.subr.bf16.mxu0 %v561
    %591 = vmatpush1.bf16.msra.mxu0 %v560
    %592 = vmatprep.subr.bf16.mxu0 %v563
    %593 = vmatpush1.bf16.msra.mxu0 %v562
    %594 = vmatprep.subr.bf16.mxu0 %v565
    %595 = vmatpush1.bf16.msra.mxu0 %v564
    %596 = vmatprep.subr.bf16.mxu0 %v567
    %597 = vmatpush1.bf16.msra.mxu0 %v566
    %598 = vmatprep.subr.bf16.mxu0 %v569
    %599 = vmatpush1.bf16.msra.mxu0 %v568
    %600 = vmatprep.subr.bf16.mxu0 %v571
    %601 = vmatpush1.bf16.msra.mxu0 %v570
    %602 = vmatprep.subr.bf16.mxu0 %v573
    %603 = vmatpush1.bf16.msra.mxu0 %v572
    %604 = vmatprep.subr.bf16.mxu0 %v575
    %605 = vmatpush1.bf16.msra.mxu0 %v574
    %606 = vmatprep.subr.bf16.mxu0 0
    %607 = vmatpush1.bf16.msra.mxu0 0
    %608 = vmatprep.subr.bf16.mxu0 0
    %609 = vmatpush1.bf16.msra.mxu0 0
    %610 = vmatprep.subr.bf16.mxu0 0
    %611 = vmatpush1.bf16.msra.mxu0 0
    %612 = vmatprep.subr.bf16.mxu0 0
    %613 = vmatpush1.bf16.msra.mxu0 0
    %614 = vmatprep.subr.bf16.mxu0 0
    %615 = vmatpush1.bf16.msra.mxu0 0
    %616 = vmatprep.subr.bf16.mxu0 0
    %617 = vmatpush1.bf16.msra.mxu0 0
    %618 = vmatprep.subr.bf16.mxu0 0
    %619 = vmatpush1.bf16.msra.mxu0 0
    %620 = vmatprep.subr.bf16.mxu0 0
    %621 = vmatpush1.bf16.msra.mxu0 0
    %622 = vmatprep.mubr.bf16.mxu0 0
    %623 = vmatmul.mubr.bf16.gmra.mrb[0].mxu0 %v588
    %v624 = vpop.f32.mrb[0].mxu0
    %v625 = vadd.f32 0.0, %v624
    %v626 = vpop.f32.mrb[0].mxu0
    %v627 = vadd.f32 0.0, %v626
    %v628 = vpop.f32.mrb[0].mxu0
    %v629 = vadd.f32 0.0, %v628
    %v630 = vpop.f32.mrb[0].mxu0
    %v631 = vadd.f32 0.0, %v630
    %632 = vdwg.mxu0
    %v635 = vunpack.c.l.b16 %v580
    %v636 = vunpack.c.l.b16 %v581
    %v637 = vpack.c.b16 %v636, %v635
    %639 = vmatprep.subr.bf16.mxu0 %v529
    %640 = vmatpush1.bf16.msra.mxu0 %v528
    %641 = vmatprep.subr.bf16.mxu0 %v531
    %642 = vmatpush1.bf16.msra.mxu0 %v530
    %643 = vmatprep.subr.bf16.mxu0 %v533
    %644 = vmatpush1.bf16.msra.mxu0 %v532
    %645 = vmatprep.subr.bf16.mxu0 %v535
    %646 = vmatpush1.bf16.msra.mxu0 %v534
    %647 = vmatprep.subr.bf16.mxu0 %v537
    %648 = vmatpush1.bf16.msra.mxu0 %v536
    %649 = vmatprep.subr.bf16.mxu0 %v539
    %650 = vmatpush1.bf16.msra.mxu0 %v538
    %651 = vmatprep.subr.bf16.mxu0 %v541
    %652 = vmatpush1.bf16.msra.mxu0 %v540
    %653 = vmatprep.subr.bf16.mxu0 %v543
    %654 = vmatpush1.bf16.msra.mxu0 %v542
    %655 = vmatprep.subr.bf16.mxu0 0
    %656 = vmatpush1.bf16.msra.mxu0 0
    %657 = vmatprep.subr.bf16.mxu0 0
    %658 = vmatpush1.bf16.msra.mxu0 0
    %659 = vmatprep.subr.bf16.mxu0 0
    %660 = vmatpush1.bf16.msra.mxu0 0
    %661 = vmatprep.subr.bf16.mxu0 0
    %662 = vmatpush1.bf16.msra.mxu0 0
    %663 = vmatprep.subr.bf16.mxu0 0
    %664 = vmatpush1.bf16.msra.mxu0 0
    %665 = vmatprep.subr.bf16.mxu0 0
    %666 = vmatpush1.bf16.msra.mxu0 0
    %667 = vmatprep.subr.bf16.mxu0 0
    %668 = vmatpush1.bf16.msra.mxu0 0
    %669 = vmatprep.subr.bf16.mxu0 0
    %670 = vmatpush1.bf16.msra.mxu0 0
    %671 = vmatprep.mubr.bf16.mxu0 0
    %672 = vmatmul.mubr.bf16.gmra.mrb[0].mxu0 %v637
    %v673 = vpop.f32.mrb[0].mxu0
    %v674 = vadd.f32 %v625, %v673
    %v675 = vpop.f32.mrb[0].mxu0
    %v676 = vadd.f32 %v627, %v675
    %v677 = vpop.f32.mrb[0].mxu0
    %v678 = vadd.f32 %v629, %v677
    %v679 = vpop.f32.mrb[0].mxu0
    %v680 = vadd.f32 %v631, %v679
    %681 = vdwg.mxu0
    %v682 = vadd.f32 %v576, %v674
    %v683 = vadd.f32 %v577, %v676
    %v684 = vadd.f32 %v578, %v678
    %v685 = vadd.f32 %v579, %v680
    %686 = vst [vmem:[#allocation2] sm:$0xff] %v682
    %687 = vst [vmem:[#allocation2 + $0x8] sm:$0xff] %v683
    %688 = vst [vmem:[#allocation2 + $0x10] sm:$0xff] %v684
    %689 = vst [vmem:[#allocation2 + $0x18] sm:$0xff] %v685
    // Predicated region
    $region42: #{tpu_custom_call.1} parent=1 // pred_check
      %p690 = pneg %p70
    $region43: #{tpu_custom_call.1} parent=1 // pred_check_branch
      %692 = sbr.rel (%p690) target = $region45
    $region44: #{tpu_custom_call.1} parent=1 // pred_region
      %v693 = vld [vmem:[#allocation2] sm:$0xff]
      %v694 = vld [vmem:[#allocation2 + $0x8] sm:$0xff]
      %v695 = vld [vmem:[#allocation2 + $0x10] sm:$0xff]
      %v696 = vld [vmem:[#allocation2 + $0x18] sm:$0xff]
      %v697 = vld [vmem:[%s5] sm:$0x3]
      %v698 = vunpack.c.l.bf16 %v697
      %v700 = vlaneseq
      %v701 = vshrl.u32 %v700, 7
      %v702 = vsub.s32 0, %v701
      %v703 = vrot.slane %v698, %v702
      %v704 = vlaneseq
      %v705 = vshrl.u32 %v704, 7
      %v706 = vsub.s32 2, %v705
      %v707 = vrot.slane %v698, %v706
      %v710 = vlaneseq
      %v711 = vshrl.u32 %v710, 7
      %v712 = vsub.s32 0, %v711
      %v713 = vrot.slane %v703, %v712
      %v714 = vlaneseq
      %v715 = vshrl.u32 %v714, 7
      %v716 = vsub.s32 0, %v715
      %v717 = vrot.slane %v707, %v716
      %v718 = vadd.f32 %v693, %v713
      %v719 = vadd.f32 %v694, %v717
      %v720 = vadd.f32 %v695, %v713
      %v721 = vadd.f32 %v696, %v717
      %v722 = vpack.c.bf16 %v720, %v718
      %v723 = vpack.c.bf16 %v721, %v719
      %v726 = vunpack.c.l.b16 %v722
      %v727 = vunpack.c.l.b16 %v723
      %v728 = vunpack.c.h.b16 %v722
      %v729 = vunpack.c.h.b16 %v723
      %v730 = vpack.c.b16 %v727, %v726
      %v731 = vpack.c.b16 %v729, %v728
      %734 = vst [vmem:[#allocation9] sm:$0xff] %v730
      %735 = vst [vmem:[#allocation9 + $0x8] sm:$0xff] %v731
    $region45: #{tpu_custom_call.1} parent=1 // pred_fallthru
      _
    // Predicated region
    $region46: #{tpu_custom_call.1} parent=1 // pred_check
      _
    $region47: #{tpu_custom_call.1} parent=1 // pred_check_branch
      %737 = sbr.rel (0) target = $region49
    $region48: #{tpu_custom_call.1} parent=1 // pred_region
      %s739 = ssub.s32 256, 256
      %740 = vsyncadd [#allocation5], %s739
      %s741 = sshll.u32 [#allocation9], 4
      %s742 = int_to_ptr.vmem [resolvable:$true] %s741
      %747 = dma.vmem_to_hbm [thread:$0]  %s742, 256, %s6, [#allocation5], 128, 128, 8
    $region49: #{tpu_custom_call.1} parent=1 // pred_fallthru
      _
    // Predicated region
    $region50: #{tpu_custom_call.1} parent=1 // pred_check
      _
    $region51: #{tpu_custom_call.1} parent=1 // pred_check_branch
      %749 = sbr.rel (0) target = $region53
    $region52: #{tpu_custom_call.1} parent=1 // pred_region
      %750 = dma.done [#allocation5], 256
    $region53: #{tpu_custom_call.1} parent=1 // pred_fallthru
      _
    %751 = vsyncpa [#allocation4], 1
    %752 = vsyncpa [#allocation7], 1
    %753 = vsyncpa [#allocation5], 1

</llo_original>
